<compile_context>
chip_gen: v7x
topology: tpu7x:2x2x1
jax: 0.10.0
libtpu: 0.0.40
codegen_flags: <defaults>
</compile_context>

<pallas_src>
import functools

import jax
import jax.numpy as jnp
from jax.experimental import pallas as pl
from jax.experimental.pallas import tpu as pltpu


def _round_up(n, m):
    return pl.cdiv(n, m) * m


def _mdn_kernel(x_ref, wh_ref, bh_ref, w3_ref, b3_ref, out_ref, *,
                n_gaussians_padded, use_bf16_transcendentals):
    G = n_gaussians_padded
    x_row = x_ref[...]                                   # (1, TB)  batch on lanes

    # Hidden layer: Linear(1, H) + tanh as a VPU broadcast (no K=1 MXU matmul).
    #   z_h^T[h, b] = tanh(w_h[h] * x[b] + b_h[h])
    pre_h = wh_ref[...] * x_row + bh_ref[...]            # (H, TB)
    if use_bf16_transcendentals:
        # v6e/v7x only: halve the f32 EUP transcendental stream (do NOT use on v5e).
        z_h = jnp.tanh(pre_h.astype(jnp.bfloat16)).astype(jnp.float32)
    else:
        z_h = jnp.tanh(pre_h)

    # Fused heads (pi | sigma | mu): one MXU matmul + one fused bias add.
    heads = jnp.dot(w3_ref[...], z_h,
                    preferred_element_type=jnp.float32) + b3_ref[...]   # (3G, TB)

    pi_logits = heads[0:G, :]
    sig_pre = heads[G:2 * G, :]
    mu = heads[2 * G:3 * G, :]

    # Softmax over the (padded) gaussian axis; padded rows carry bias -1e30 -> exp ~ 0.
    m = jnp.max(pi_logits, axis=0, keepdims=True)
    shifted = pi_logits - m
    if use_bf16_transcendentals:
        e = jnp.exp(shifted.astype(jnp.bfloat16)).astype(jnp.float32)
    else:
        e = jnp.exp(shifted)
    denom = jnp.sum(e, axis=0, keepdims=True)
    # Exact reciprocal: approx=True left rows normalized only to ~1e-3 (failed check).
    pi = e * pl.reciprocal(denom, approx=False)

    # Numerically stable softplus.
    neg_abs = -jnp.abs(sig_pre)
    if use_bf16_transcendentals:
        exp_na = jnp.exp(neg_abs.astype(jnp.bfloat16)).astype(jnp.float32)
    else:
        exp_na = jnp.exp(neg_abs)
    sigma = jnp.maximum(sig_pre, 0.0) + jnp.log1p(exp_na)

    # Lane-dense, sublane-aligned stores into the fused (3G, TB) output slab.
    out_ref[0:G, :] = pi
    out_ref[G:2 * G, :] = sigma
    out_ref[2 * G:3 * G, :] = mu


def _choose_tile(batch, block_b):
    """Pick a lane-aligned batch tile; keep >= 2 grid steps when the batch allows
    so v7x megacore ('parallel' batch axis) can shard across both TensorCores."""
    n_lanes = pl.cdiv(batch, 128)                 # batch in units of 128 lanes
    max_lanes = max(1, block_b // 128)
    tb_lanes = min(max_lanes, n_lanes)
    if tb_lanes == n_lanes and n_lanes >= 2:
        tb_lanes = pl.cdiv(n_lanes, 2)
    tb = tb_lanes * 128
    b_pad = _round_up(batch, tb)
    return tb, b_pad


def _mdn_pallas_transposed(x, params, *, block_b, use_bf16_transcendentals):
    """Run the fused kernel; returns (out_t, G, Gp, B) with out_t = (3*Gp, B_pad)."""
    B = x.shape[0]
    H = params["w_h"].shape[1]
    G = params["w_pi"].shape[1]
    Gp = _round_up(G, 8)        # sublane-align each head section for any n_gaussians

    TB, B_pad = _choose_tile(B, block_b)

    # ---- layout plumbing (wrapper side): batch on the 128-lane axis ----
    x_t = jnp.zeros((1, B_pad), jnp.float32).at[0, :B].set(
        x[:, 0].astype(jnp.float32))                                    # (1, B_pad)

    wh_col = params["w_h"].T.astype(jnp.float32)                        # (H, 1)
    bh_col = params["b_h"].T.astype(jnp.float32)                        # (H, 1)

    def pad_head(w, b, pad_bias):
        w_p = jnp.zeros((H, Gp), jnp.float32).at[:, :G].set(w.astype(jnp.float32))
        b_p = jnp.full((1, Gp), pad_bias, jnp.float32).at[0, :G].set(
            b[0].astype(jnp.float32))
        return w_p, b_p

    # Padded pi logits get a huge negative bias -> exp() ~ 0 -> softmax unpolluted.
    w_pi, b_pi = pad_head(params["w_pi"], params["b_pi"], -1e30)
    w_sg, b_sg = pad_head(params["w_sigma"], params["b_sigma"], 0.0)
    w_mu, b_mu = pad_head(params["w_mu"], params["b_mu"], 0.0)

    w3 = jnp.concatenate([w_pi, w_sg, w_mu], axis=1).T                  # (3Gp, H)
    b3 = jnp.concatenate([b_pi, b_sg, b_mu], axis=1).T                  # (3Gp, 1)

    def resident(shape):
        # Tiny weights: full array, resident in VMEM across all grid steps.
        return pl.BlockSpec(shape, lambda i: (0, 0))

    cost = pl.CostEstimate(
        flops=2 * 3 * Gp * H * B_pad,                 # fused head matmul
        transcendentals=(H + 3 * Gp) * B_pad,         # tanh + softmax/softplus exp/log1p
        bytes_accessed=4 * B_pad * (1 + 3 * Gp),      # x in + fused slab out
    )

    out_t = pl.pallas_call(
        functools.partial(_mdn_kernel, n_gaussians_padded=Gp,
                          use_bf16_transcendentals=use_bf16_transcendentals),
        out_shape=jax.ShapeDtypeStruct((3 * Gp, B_pad), jnp.float32),
        grid=(B_pad // TB,),
        in_specs=[
            pl.BlockSpec((1, TB), lambda i: (0, i)),   # x tile, lane-dense
            resident((H, 1)),
            resident((H, 1)),
            resident((3 * Gp, H)),
            resident((3 * Gp, 1)),
        ],
        out_specs=pl.BlockSpec((3 * Gp, TB), lambda i: (0, i)),
        compiler_params=pltpu.CompilerParams(
            dimension_semantics=("parallel",)),        # v7x: shard batch over 2 TCs
        cost_estimate=cost,
    )(x_t, wh_col, bh_col, w3, b3)

    return out_t, G, Gp, B


def mdn_forward_lane_major(x, params, *, block_b=16384,
                           use_bf16_transcendentals=False):
    """Returns (pi_t, sigma_t, mu_t), each (G, B), batch on the lane axis.

    Preferred for large B on v5e/v6e: avoids the HBM round-trip of re-transposing
    the output slab.  Feed this layout directly into a fused downstream kernel
    (e.g. the MDN NLL loss)."""
    out_t, G, Gp, B = _mdn_pallas_transposed(
        x, params, block_b=block_b,
        use_bf16_transcendentals=use_bf16_transcendentals)
    pi_t = out_t[0:G, :B]
    sigma_t = out_t[Gp:Gp + G, :B]
    mu_t = out_t[2 * Gp:2 * Gp + G, :B]
    return pi_t, sigma_t, mu_t


def mdn_forward(x, params, *, block_b=16384, use_bf16_transcendentals=False):
    """x: (B, 1) float32.  Returns (pi, sigma, mu), each (B, G) float32 (PyTorch layout).

    Note: the final transpose back to (B, G) re-reads/re-writes the output slab in HBM;
    for large-B pipelines prefer `mdn_forward_lane_major` and keep consumers transposed."""
    out_t, G, Gp, B = _mdn_pallas_transposed(
        x, params, block_b=block_b,
        use_bf16_transcendentals=use_bf16_transcendentals)
    out = out_t[:, :B].T                               # (B, 3Gp)
    return out[:, 0:G], out[:, Gp:Gp + G], out[:, 2 * Gp:2 * Gp + G]


def init_mdn_params(key, n_hidden, n_gaussians):
    """Deterministic synthetic init (PyTorch-style uniform fan-in bounds)."""
    ks = jax.random.split(key, 8)

    def lin(kw, kb, fan_in, fan_out):
        bound = 1.0 / (fan_in ** 0.5)
        w = jax.random.uniform(kw, (fan_in, fan_out), jnp.float32, -bound, bound)
        b = jax.random.uniform(kb, (1, fan_out), jnp.float32, -bound, bound)
        return w, b

    w_h, b_h = lin(ks[0], ks[1], 1, n_hidden)
    w_pi, b_pi = lin(ks[2], ks[3], n_hidden, n_gaussians)
    w_sigma, b_sigma = lin(ks[4], ks[5], n_hidden, n_gaussians)
    w_mu, b_mu = lin(ks[6], ks[7], n_hidden, n_gaussians)

    return dict(w_h=w_h, b_h=b_h,
                w_pi=w_pi, b_pi=b_pi,
                w_sigma=w_sigma, b_sigma=b_sigma,
                w_mu=w_mu, b_mu=b_mu)


def mdn_reference(x, p):
    """Pure-JAX reference for correctness check (intended semantics of the module)."""
    z_h = jnp.tanh(x @ p["w_h"] + p["b_h"])
    pi = jax.nn.softmax(z_h @ p["w_pi"] + p["b_pi"], axis=-1)
    sigma = jax.nn.softplus(z_h @ p["w_sigma"] + p["b_sigma"])
    mu = z_h @ p["w_mu"] + p["b_mu"]
    return pi, sigma, mu


if __name__ == "__main__":
    key = jax.random.PRNGKey(0)
    k_param, k_x = jax.random.split(key)

    n_hidden = 32
    n_gaussians = 8
    batch = 8

    params = init_mdn_params(k_param, n_hidden, n_gaussians)
    x = jax.random.normal(k_x, (batch, 1), jnp.float32)

    pi, sigma, mu = jax.block_until_ready(mdn_forward(x, params))

    # Sanity check against the pure-JAX reference (exact reciprocal -> tight tolerance).
    pi_r, sigma_r, mu_r = mdn_reference(x, params)
    assert pi.shape == (batch, n_gaussians)
    assert sigma.shape == (batch, n_gaussians)
    assert mu.shape == (batch, n_gaussians)
    assert jnp.allclose(pi, pi_r, atol=1e-4, rtol=1e-4)
    assert jnp.allclose(sigma, sigma_r, atol=1e-4, rtol=1e-4)
    assert jnp.allclose(mu, mu_r, atol=1e-4, rtol=1e-4)
    assert jnp.allclose(jnp.sum(pi, axis=-1), 1.0, atol=1e-4)

    # Lane-major (transposed) fast path matches too.
    pi_t, sigma_t, mu_t = jax.block_until_ready(mdn_forward_lane_major(x, params))
    assert jnp.allclose(pi_t.T, pi_r, atol=1e-4, rtol=1e-4)
    assert jnp.allclose(sigma_t.T, sigma_r, atol=1e-4, rtol=1e-4)
    assert jnp.allclose(mu_t.T, mu_r, atol=1e-4, rtol=1e-4)

    print("KERNEL_OK")
</pallas_src>

<mosaic_0001>
module attributes {stable_mosaic.version = 11 : i64} {
  func.func @_mdn_kernel(%arg0: i32, %arg1: memref<1x128xf32, #tpu.memory_space<vmem>>, %arg2: memref<32x1xf32, #tpu.memory_space<vmem>>, %arg3: memref<32x1xf32, #tpu.memory_space<vmem>>, %arg4: memref<24x32xf32, #tpu.memory_space<vmem>>, %arg5: memref<24x1xf32, #tpu.memory_space<vmem>>, %arg6: memref<24x128xf32, #tpu.memory_space<vmem>>) attributes {dimension_semantics = [#tpu.dimension_semantics<parallel>], iteration_bounds = array<i64: 1>, scalar_prefetch = 0 : i64, scratch_operands = 0 : i64, tpu.core_type = #tpu.core_type<tc>, window_params = [{transform_indices = @transform_0, window_bounds = array<i64: 1, 128>}, {pipeline_mode = #tpu.pipeline_mode<synchronous>, transform_indices = @transform_1, window_bounds = array<i64: 32, 1>}, {pipeline_mode = #tpu.pipeline_mode<synchronous>, transform_indices = @transform_2, window_bounds = array<i64: 32, 1>}, {pipeline_mode = #tpu.pipeline_mode<synchronous>, transform_indices = @transform_3, window_bounds = array<i64: 24, 32>}, {pipeline_mode = #tpu.pipeline_mode<synchronous>, transform_indices = @transform_4, window_bounds = array<i64: 24, 1>}, {transform_indices = @transform_5, window_bounds = array<i64: 24, 128>}]} {
    %c0 = arith.constant 0 : index
    %c0_0 = arith.constant 0 : index
    %0 = vector.load %arg1[%c0, %c0_0] : memref<1x128xf32, #tpu.memory_space<vmem>>, vector<1x128xf32>
    %c0_1 = arith.constant 0 : index
    %c0_2 = arith.constant 0 : index
    %1 = vector.load %arg2[%c0_1, %c0_2] : memref<32x1xf32, #tpu.memory_space<vmem>>, vector<32x1xf32>
    %2 = vector.broadcast %1 : vector<32x1xf32> to vector<32x128xf32>
    %3 = vector.broadcast %0 : vector<1x128xf32> to vector<32x128xf32>
    %4 = arith.mulf %2, %3 : vector<32x128xf32>
    %c0_3 = arith.constant 0 : index
    %c0_4 = arith.constant 0 : index
    %5 = vector.load %arg3[%c0_3, %c0_4] : memref<32x1xf32, #tpu.memory_space<vmem>>, vector<32x1xf32>
    %6 = vector.broadcast %5 : vector<32x1xf32> to vector<32x128xf32>
    %7 = arith.addf %4, %6 : vector<32x128xf32>
    %8 = math.tanh %7 : vector<32x128xf32>
    %c0_5 = arith.constant 0 : index
    %c0_6 = arith.constant 0 : index
    %9 = vector.load %arg4[%c0_5, %c0_6] : memref<24x32xf32, #tpu.memory_space<vmem>>, vector<24x32xf32>
    %cst = arith.constant dense<0.000000e+00> : vector<24x128xf32>
    %10 = tpu.matmul %9, %8, %cst {dimension_numbers = #tpu.dot_dimension_numbers<[1], [0], [0], [1], [0, 0, 1, 1], [], []>} : vector<24x32xf32>, vector<32x128xf32>, vector<24x128xf32> -> vector<24x128xf32>
    %c0_7 = arith.constant 0 : index
    %c0_8 = arith.constant 0 : index
    %11 = vector.load %arg5[%c0_7, %c0_8] : memref<24x1xf32, #tpu.memory_space<vmem>>, vector<24x1xf32>
    %12 = vector.broadcast %11 : vector<24x1xf32> to vector<24x128xf32>
    %13 = arith.addf %10, %12 : vector<24x128xf32>
    %14 = vector.extract_strided_slice %13 {offsets = [0, 0], sizes = [8, 128], strides = [1, 1]} : vector<24x128xf32> to vector<8x128xf32>
    %15 = vector.extract_strided_slice %13 {offsets = [8, 0], sizes = [8, 128], strides = [1, 1]} : vector<24x128xf32> to vector<8x128xf32>
    %16 = vector.extract_strided_slice %13 {offsets = [16, 0], sizes = [8, 128], strides = [1, 1]} : vector<24x128xf32> to vector<8x128xf32>
    %cst_9 = arith.constant dense<0xFF800000> : vector<128xf32>
    %17 = vector.multi_reduction <maximumf>, %14, %cst_9 [0] : vector<8x128xf32> to vector<128xf32>
    %18 = vector.shape_cast %17 : vector<128xf32> to vector<1x128xf32>
    %19 = vector.broadcast %18 : vector<1x128xf32> to vector<8x128xf32>
    %20 = arith.subf %14, %19 : vector<8x128xf32>
    %21 = math.exp %20 : vector<8x128xf32>
    %cst_10 = arith.constant dense<0.000000e+00> : vector<128xf32>
    %22 = vector.multi_reduction <add>, %21, %cst_10 [0] : vector<8x128xf32> to vector<128xf32>
    %23 = vector.shape_cast %22 : vector<128xf32> to vector<1x128xf32>
    %24 = tpu.reciprocal %23 : vector<1x128xf32> -> vector<1x128xf32>
    %25 = vector.broadcast %24 : vector<1x128xf32> to vector<8x128xf32>
    %26 = arith.mulf %21, %25 : vector<8x128xf32>
    %27 = math.absf %15 : vector<8x128xf32>
    %cst_11 = arith.constant 0.000000e+00 : f32
    %28 = vector.broadcast %cst_11 : f32 to vector<8x128xf32>
    %29 = arith.subf %28, %27 : vector<8x128xf32>
    %30 = math.exp %29 : vector<8x128xf32>
    %cst_12 = arith.constant 0.000000e+00 : f32
    %31 = vector.broadcast %cst_12 : f32 to vector<8x128xf32>
    %32 = arith.maximumf %15, %31 : vector<8x128xf32>
    %33 = math.log1p %30 : vector<8x128xf32>
    %34 = arith.addf %32, %33 : vector<8x128xf32>
    %c0_13 = arith.constant 0 : index
    %c0_14 = arith.constant 0 : index
    %35 = vector.load %arg6[%c0_13, %c0_14] : memref<24x128xf32, #tpu.memory_space<vmem>>, vector<8x128xf32>
    tpu.vector_store %arg6[%c0_13, %c0_14], %26 {strides = array<i32>} : memref<24x128xf32, #tpu.memory_space<vmem>>, vector<8x128xf32>,
    %c8 = arith.constant 8 : index
    %c0_15 = arith.constant 0 : index
    %36 = vector.load %arg6[%c8, %c0_15] : memref<24x128xf32, #tpu.memory_space<vmem>>, vector<8x128xf32>
    tpu.vector_store %arg6[%c8, %c0_15], %34 {strides = array<i32>} : memref<24x128xf32, #tpu.memory_space<vmem>>, vector<8x128xf32>,
    %c16 = arith.constant 16 : index
    %c0_16 = arith.constant 0 : index
    %37 = vector.load %arg6[%c16, %c0_16] : memref<24x128xf32, #tpu.memory_space<vmem>>, vector<8x128xf32>
    tpu.vector_store %arg6[%c16, %c0_16], %16 {strides = array<i32>} : memref<24x128xf32, #tpu.memory_space<vmem>>, vector<8x128xf32>,
    return
  }
  func.func @transform_0(%arg0: i32) -> (i32, i32) {
    %c0_i32 = arith.constant 0 : i32
    %c0_i32_0 = arith.constant 0 : i32
    return %c0_i32, %arg0 : i32, i32
  }
  func.func @transform_1(%arg0: i32) -> (i32, i32) {
    %c0_i32 = arith.constant 0 : i32
    %c0_i32_0 = arith.constant 0 : i32
    %c0_i32_1 = arith.constant 0 : i32
    return %c0_i32, %c0_i32_0 : i32, i32
  }
  func.func @transform_2(%arg0: i32) -> (i32, i32) {
    %c0_i32 = arith.constant 0 : i32
    %c0_i32_0 = arith.constant 0 : i32
    %c0_i32_1 = arith.constant 0 : i32
    return %c0_i32, %c0_i32_0 : i32, i32
  }
  func.func @transform_3(%arg0: i32) -> (i32, i32) {
    %c0_i32 = arith.constant 0 : i32
    %c0_i32_0 = arith.constant 0 : i32
    %c0_i32_1 = arith.constant 0 : i32
    return %c0_i32, %c0_i32_0 : i32, i32
  }
  func.func @transform_4(%arg0: i32) -> (i32, i32) {
    %c0_i32 = arith.constant 0 : i32
    %c0_i32_0 = arith.constant 0 : i32
    %c0_i32_1 = arith.constant 0 : i32
    return %c0_i32, %c0_i32_0 : i32, i32
  }
  func.func @transform_5(%arg0: i32) -> (i32, i32) {
    %c0_i32 = arith.constant 0 : i32
    %c0_i32_0 = arith.constant 0 : i32
    return %c0_i32, %arg0 : i32, i32
  }
}

</mosaic_0001>

<llo_original>
// kernel: tpu_custom_call.1
$region0: #{tpu_custom_call.1}
  #allocation0 [shape = 'u32[]', space=smem, size = 0x4, offset = 0x4, fixed_abs, tag = 'smem constant byte address 0x4 - core index']
  #allocation1 [shape = 'u32[144,128]{1,0:T(1,128)}', space=vmem, size = 0x12000, scoped, tag = 'internal scratch']
  %s0 = inlined_call_operand.vmem [shape: f32[1,128], index: 0, kind: input, shape index: {}]
  %s1 = inlined_call_operand.vmem [shape: f32[32,1], index: 1, kind: input, shape index: {}]
  %s2 = inlined_call_operand.vmem [shape: f32[32,1], index: 2, kind: input, shape index: {}]
  %s3 = inlined_call_operand.vmem [shape: f32[24,32], index: 3, kind: input, shape index: {}]
  %s4 = inlined_call_operand.vmem [shape: f32[24,1], index: 4, kind: input, shape index: {}]
  %s5 = inlined_call_operand.hbm [shape: f32[24,128], index: 5, kind: output, shape index: {}]
  %s6 = sld [smem:[#allocation0]]
  $region30: #{tpu_custom_call.1} parent=0
    _
  %s8 = ssub.s32 1, %s6
  %s9 = scalar_select 0, %s8, %s6
  $region1: #{tpu_custom_call.1} parent=0
    #allocation2 [shape = 'u8[12288]{0}', space=vmem, size = 0x3000, scoped, tag = 'output window, operand 0, single buffered']
    #allocation3 [shape = 's32[1]{0}', space=sflag, size = 0x4, scoped, tag = 'scoped memory for tpu_custom_call.1']
    %10 = vsyncpa [#allocation3], 0
    // Predicated region
    $region2: #{tpu_custom_call.1} parent=1 // pred_check
      _
    $region3: #{tpu_custom_call.1} parent=1 // pred_check_branch
      %12 = sbr.rel (0) target = $region5
    $region4: #{tpu_custom_call.1} parent=1 // pred_region
      _
    $region5: #{tpu_custom_call.1} parent=1 // pred_fallthru
      _
    // Predicated region
    $region6: #{tpu_custom_call.1} parent=1 // pred_check
      _
    $region7: #{tpu_custom_call.1} parent=1 // pred_check_branch
      %14 = sbr.rel (0) target = $region9
    $region8: #{tpu_custom_call.1} parent=1 // pred_region
      _
    $region9: #{tpu_custom_call.1} parent=1 // pred_fallthru
      _
    // Predicated region
    $region10: #{tpu_custom_call.1} parent=1 // pred_check
      _
    $region11: #{tpu_custom_call.1} parent=1 // pred_check_branch
      %16 = sbr.rel (0) target = $region13
    $region12: #{tpu_custom_call.1} parent=1 // pred_region
      _
    $region13: #{tpu_custom_call.1} parent=1 // pred_fallthru
      _
    // Predicated region
    $region14: #{tpu_custom_call.1} parent=1 // pred_check
      _
    $region15: #{tpu_custom_call.1} parent=1 // pred_check_branch
      %18 = sbr.rel (0) target = $region17
    $region16: #{tpu_custom_call.1} parent=1 // pred_region
      _
    $region17: #{tpu_custom_call.1} parent=1 // pred_fallthru
      _
    // Predicated region
    $region18: #{tpu_custom_call.1} parent=1 // pred_check
      _
    $region19: #{tpu_custom_call.1} parent=1 // pred_check_branch
      %20 = sbr.rel (0) target = $region21
    $region20: #{tpu_custom_call.1} parent=1 // pred_region
      _
    $region21: #{tpu_custom_call.1} parent=1 // pred_fallthru
      _
    %v21 = vld [vmem:[%s0] sm:$0x1]
    %v22 = vld [vmem:[%s1] sm:$0xff]
    %v23 = vld [vmem:[%s1 + $0x8] sm:$0xff]
    %v24 = vld [vmem:[%s1 + $0x10] sm:$0xff]
    %v25 = vld [vmem:[%s1 + $0x18] sm:$0xff]
    %27 = vset.pattern.permute.xlu0 0
    %28 = vperm.xlu0 %27, %v22
    %v29 = vpop.permute.xlu0 %28
    %32 = vset.pattern.permute.xlu0 0
    %33 = vperm.xlu0 %32, %v23
    %v34 = vpop.permute.xlu0 %33
    %37 = vset.pattern.permute.xlu0 0
    %38 = vperm.xlu0 %37, %v24
    %v39 = vpop.permute.xlu0 %38
    %42 = vset.pattern.permute.xlu0 0
    %43 = vperm.xlu0 %42, %v25
    %v44 = vpop.permute.xlu0 %43
    %v47 = vlaneseq
    %v48 = vshrl.u32 %v47, 7
    %v49 = vsub.s32 0, %v48
    %v50 = vrot.slane %v21, %v49
    %v52 = vmul.f32 %v29, %v50
    %v53 = vmul.f32 %v34, %v50
    %v54 = vmul.f32 %v39, %v50
    %v55 = vmul.f32 %v44, %v50
    %v56 = vld [vmem:[%s2] sm:$0xff]
    %v57 = vld [vmem:[%s2 + $0x8] sm:$0xff]
    %v58 = vld [vmem:[%s2 + $0x10] sm:$0xff]
    %v59 = vld [vmem:[%s2 + $0x18] sm:$0xff]
    %61 = vset.pattern.permute.xlu0 0
    %62 = vperm.xlu0 %61, %v56
    %v63 = vpop.permute.xlu0 %62
    %66 = vset.pattern.permute.xlu0 0
    %67 = vperm.xlu0 %66, %v57
    %v68 = vpop.permute.xlu0 %67
    %71 = vset.pattern.permute.xlu0 0
    %72 = vperm.xlu0 %71, %v58
    %v73 = vpop.permute.xlu0 %72
    %76 = vset.pattern.permute.xlu0 0
    %77 = vperm.xlu0 %76, %v59
    %v78 = vpop.permute.xlu0 %77
    %v80 = vadd.f32 %v52, %v63
    %v81 = vadd.f32 %v53, %v68
    %v82 = vadd.f32 %v54, %v73
    %v83 = vadd.f32 %v55, %v78
    %v84 = vtanh.pop %v80
    %v85 = vtanh.pop %v81
    %v86 = vtanh.pop %v82
    %v87 = vtanh.pop %v83
    %v88 = vld [vmem:[%s3] sm:$0xff]
    %v89 = vld [vmem:[%s3 + $0x8] sm:$0xff]
    %v90 = vld [vmem:[%s3 + $0x10] sm:$0xff]
    %v91 = vld [vmem:[%s4] sm:$0xff]
    %v92 = vld [vmem:[%s4 + $0x8] sm:$0xff]
    %v93 = vld [vmem:[%s4 + $0x10] sm:$0xff]
    %95 = vset.pattern.permute.xlu0 0
    %96 = vperm.xlu0 %95, %v91
    %v97 = vpop.permute.xlu0 %96
    %100 = vset.pattern.permute.xlu0 0
    %101 = vperm.xlu0 %100, %v92
    %v102 = vpop.permute.xlu0 %101
    %105 = vset.pattern.permute.xlu0 0
    %106 = vperm.xlu0 %105, %v93
    %v107 = vpop.permute.xlu0 %106
    %vm109 = vcmask 261120
    %v111 = vsel %vm109, %v88, 0
    %v114 = vsel %vm109, %v89, 0
    %v117 = vsel %vm109, %v90, 0
    %119 = vmatprep.subr.mxu0 0.0
    %120 = vmatpush1.msra.mxu0 %v84
    %121 = vmatprep.subr.mxu0 0.0
    %122 = vmatpush1.msra.mxu0 %v85
    %123 = vmatprep.subr.mxu0 0.0
    %124 = vmatpush1.msra.mxu0 %v86
    %125 = vmatprep.subr.mxu0 0.0
    %126 = vmatpush1.msra.mxu0 %v87
    %127 = vmatprep.subr.mxu0 0.0
    %128 = vmatpush1.msra.mxu0 0.0
    %129 = vmatprep.subr.mxu0 0.0
    %130 = vmatpush1.msra.mxu0 0.0
    %131 = vmatprep.subr.mxu0 0.0
    %132 = vmatpush1.msra.mxu0 0.0
    %133 = vmatprep.subr.mxu0 0.0
    %134 = vmatpush1.msra.mxu0 0.0
    %135 = vmatprep.subr.mxu0 0.0
    %136 = vmatpush1.msra.mxu0 0.0
    %137 = vmatprep.subr.mxu0 0.0
    %138 = vmatpush1.msra.mxu0 0.0
    %139 = vmatprep.subr.mxu0 0.0
    %140 = vmatpush1.msra.mxu0 0.0
    %141 = vmatprep.subr.mxu0 0.0
    %142 = vmatpush1.msra.mxu0 0.0
    %143 = vmatprep.subr.mxu0 0.0
    %144 = vmatpush1.msra.mxu0 0.0
    %145 = vmatprep.subr.mxu0 0.0
    %146 = vmatpush1.msra.mxu0 0.0
    %147 = vmatprep.subr.mxu0 0.0
    %148 = vmatpush1.msra.mxu0 0.0
    %149 = vmatprep.subr.mxu0 0.0
    %150 = vmatpush1.msra.mxu0 0.0
    %151 = vmatprep.subr.mxu0 0.0
    %152 = vmatpush1.msra.mxu0 0.0
    %153 = vmatprep.subr.mxu0 0.0
    %154 = vmatpush1.msra.mxu0 0.0
    %155 = vmatprep.subr.mxu0 0.0
    %156 = vmatpush1.msra.mxu0 0.0
    %157 = vmatprep.subr.mxu0 0.0
    %158 = vmatpush1.msra.mxu0 0.0
    %159 = vmatprep.subr.mxu0 0.0
    %160 = vmatpush1.msra.mxu0 0.0
    %161 = vmatprep.subr.mxu0 0.0
    %162 = vmatpush1.msra.mxu0 0.0
    %163 = vmatprep.subr.mxu0 0.0
    %164 = vmatpush1.msra.mxu0 0.0
    %165 = vmatprep.subr.mxu0 0.0
    %166 = vmatpush1.msra.mxu0 0.0
    %167 = vmatprep.subr.mxu0 0.0
    %168 = vmatpush1.msra.mxu0 0.0
    %169 = vmatprep.subr.mxu0 0.0
    %170 = vmatpush1.msra.mxu0 0.0
    %171 = vmatprep.subr.mxu0 0.0
    %172 = vmatpush1.msra.mxu0 0.0
    %173 = vmatprep.subr.mxu0 0.0
    %174 = vmatpush1.msra.mxu0 0.0
    %175 = vmatprep.subr.mxu0 0.0
    %176 = vmatpush1.msra.mxu0 0.0
    %177 = vmatprep.subr.mxu0 0.0
    %178 = vmatpush1.msra.mxu0 0.0
    %179 = vmatprep.subr.mxu0 0.0
    %180 = vmatpush1.msra.mxu0 0.0
    %181 = vmatprep.subr.mxu0 0.0
    %182 = vmatpush1.msra.mxu0 0.0
    %183 = vmatprep.mubr.f32.mxu0 0.0
    %184 = vmatmul.mubr.f32.gmra.mrb[0].mxu0 %v111
    %v185 = vpop.f32.mrb[0].mxu0
    %v186 = vadd.f32 %v97, %v185
    %v187 = vpop.f32.mrb[0].mxu0
    %188 = vmatprep.mubr.f32.mxu0 0.0
    %189 = vmatmul.mubr.f32.gmra.mrb[0].mxu0 %v114
    %v190 = vpop.f32.mrb[0].mxu0
    %v191 = vadd.f32 %v102, %v190
    %v192 = vpop.f32.mrb[0].mxu0
    %193 = vmatprep.mubr.f32.mxu0 0.0
    %194 = vmatmul.mubr.f32.gmra.mrb[0].mxu0 %v117
    %v195 = vpop.f32.mrb[0].mxu0
    %v196 = vadd.f32 %v107, %v195
    %v197 = vpop.f32.mrb[0].mxu0
    %198 = vdwg.mxu0
    %v199 = vrot.slane %v186, 4
    %v200 = vmax.f32 %v186, %v199
    %v201 = vrot.slane %v200, 2
    %v202 = vmax.f32 %v200, %v201
    %v203 = vrot.slane %v202, 1
    %v204 = vmax.f32 %v202, %v203
    %v205 = vsub.f32 %v186, %v204
    %v206 = vmul.f32 %v205, 1.442695
    %v207 = vpow.pop %v206
    %v208 = vrot.slane %v207, 4
    %v209 = vadd.f32 %v207, %v208
    %v210 = vrot.slane %v209, 2
    %v211 = vadd.f32 %v209, %v210
    %v212 = vrot.slane %v211, 1
    %v213 = vadd.f32 %v211, %v212
    %v214 = vrcp.pop %v213
    %v215 = vmul.f32 %v207, %v214
    %v216 = vand.u32 2147483647, %v191
    %v217 = vsub.f32 0.0, %v216
    %v218 = vmul.f32 %v217, 1.442695
    %v219 = vpow.pop %v218
    %v220 = vmax.f32 %v191, 0.0
    %v221 = vadd.f32 %v219, 1.0
    %v222 = vlog2.pop %v221
    %v223 = vmul.f32 %v222, 0.6931472
    %v224 = vmul.f32 -0.5, %v219
    %v225 = vadd.f32 %v224, 1.0
    %v226 = vmul.f32 %v225, %v219
    %v227 = vand.u32 2147483647, %v219
    %vm228 = vcmp.lt.f32.partialorder %v227, 0.0004427343
    %v229 = vsel %vm228, %v226, %v223
    %v230 = vadd.f32 %v220, %v229
    %231 = vst [vmem:[#allocation2] sm:$0xff] %v215
    %232 = vst [vmem:[#allocation2 + $0x8] sm:$0xff] %v230
    %233 = vst [vmem:[#allocation2 + $0x10] sm:$0xff] %v196
    // Predicated region
    $region22: #{tpu_custom_call.1} parent=1 // pred_check
      _
    $region23: #{tpu_custom_call.1} parent=1 // pred_check_branch
      %235 = sbr.rel (0) target = $region25
    $region24: #{tpu_custom_call.1} parent=1 // pred_region
      %s237 = ssub.s32 384, 384
      %238 = vsyncadd [#allocation3], %s237
      %s239 = sshll.u32 [#allocation2], 4
      %s240 = int_to_ptr.vmem [resolvable:$true] %s239
      %245 = dma.vmem_to_hbm [thread:$0]  %s240, 384, %s5, [#allocation3], 128, 128, 8
    $region25: #{tpu_custom_call.1} parent=1 // pred_fallthru
      _
    // Predicated region
    $region26: #{tpu_custom_call.1} parent=1 // pred_check
      _
    $region27: #{tpu_custom_call.1} parent=1 // pred_check_branch
      %247 = sbr.rel (0) target = $region29
    $region28: #{tpu_custom_call.1} parent=1 // pred_region
      %248 = dma.done [#allocation3], 384
    $region29: #{tpu_custom_call.1} parent=1 // pred_fallthru
      _
    %249 = vsyncpa [#allocation3], 1

</llo_original>
